<compile_context>
chip_gen: v7x
topology: tpu7x:2x2x1
jax: 0.10.0
libtpu: 0.0.40
codegen_flags: <defaults>
</compile_context>

<pallas_src>
import functools
import math

import jax
import jax.numpy as jnp
from jax import lax
from jax.experimental import pallas as pl
from jax.experimental.pallas import tpu as pltpu


# ----------------------------- Pallas kernel -------------------------------

def _global_pointer_kernel(qw_ref, kw_ref, ev_ref, *rest, ct, tril_mask, mxu_dtype):
    """One (batch, event-tile) grid step.

    qw_ref   : (1, S, D)      RoPE'd query block for batch b
    kw_ref   : (1, S, D)      RoPE'd key   block for batch b
    ev_ref   : (Ct, 1, D)     pre-scaled event embeddings for this tile
    bias_ref : (S, S)         (only if tril_mask) pre-scaled additive mask bias
    o_ref    : (1, Ct, S, S)  logits[b, c0:c0+Ct]
    """
    if tril_mask:
        bias_ref, o_ref = rest
    else:
        (o_ref,) = rest

    q = qw_ref[0]                        # (S, D)
    k = kw_ref[0]                        # (S, D)
    e = ev_ref[...]                      # (Ct, 1, D)
    s, d = q.shape

    # Broadcast each event embedding over the query rows and fold all Ct event
    # types into the MXU M dimension: one (Ct*S, D) @ (D, S) matmul per step.
    qe = (e * q[None, :, :]).reshape(ct * s, d)       # (Ct*S, D)
    if mxu_dtype is not None:
        qe = qe.astype(mxu_dtype)
        k = k.astype(mxu_dtype)
    logits = lax.dot_general(
        qe, k,
        dimension_numbers=(((1,), (1,)), ((), ())),   # contract on D, no transpose
        preferred_element_type=jnp.float32)           # (Ct*S, S)
    logits = logits.reshape(ct, s, s)

    if tril_mask:
        logits = logits + bias_ref[...][None]         # bias already holds -1e12/sqrt(D)

    o_ref[0] = logits.astype(o_ref.dtype)


def _choose_event_tile(C, S, D, out_itemsize, budget_bytes):
    """Largest divisor of C whose per-step VMEM footprint fits the budget."""
    best = 1
    for ct in range(1, C + 1):
        if C % ct:
            continue
        est = (2 * ct * S * S * out_itemsize    # double-buffered output block
               + ct * S * S * 4                 # fp32 logits temporary
               + ct * S * D * 4                 # qe temporary
               + 2 * 2 * S * D * 4              # double-buffered q / k blocks
               + 2 * S * S * 4                  # mask bias (+ slack)
               + 2 * ct * D * 4)                # event block
        if est <= budget_bytes:
            best = ct
    return best


def global_pointer_logits(qw, kw, event_scaled, *, head_size, tril_mask=True,
                          out_dtype=jnp.float32, mxu_dtype=None,
                          vmem_budget_bytes=32 * 1024 * 1024,
                          vmem_limit_bytes=48 * 1024 * 1024):
    """qw, kw: [B, S, D]; event_scaled: [C, D] (already * head_size**-0.5)
    ->  logits [B, C, S, S]."""
    B, S, D = qw.shape
    C = event_scaled.shape[0]

    ct = _choose_event_tile(C, S, D, jnp.dtype(out_dtype).itemsize,
                            vmem_budget_bytes)
    ev3 = event_scaled.reshape(C, 1, D)   # block last-two dims == full dims

    kernel = functools.partial(_global_pointer_kernel, ct=ct,
                               tril_mask=tril_mask, mxu_dtype=mxu_dtype)

    in_specs = [
        pl.BlockSpec((1, S, D), lambda b, cc: (b, 0, 0)),
        pl.BlockSpec((1, S, D), lambda b, cc: (b, 0, 0)),
        pl.BlockSpec((ct, 1, D), lambda b, cc: (cc, 0, 0)),
    ]
    args = [qw, kw, ev3]

    if tril_mask:
        # Strictly-lower-triangular additive bias with the 1/sqrt(head_size)
        # scale folded in, so the kernel only does one add (bias stays VMEM
        # resident thanks to the constant index_map).
        scale = head_size ** -0.5
        bias = jnp.tril(jnp.full((S, S), -1e12 * scale, dtype=jnp.float32), -1)
        in_specs.append(pl.BlockSpec((S, S), lambda b, cc: (0, 0)))
        args.append(bias)

    return pl.pallas_call(
        kernel,
        out_shape=jax.ShapeDtypeStruct((B, C, S, S), out_dtype),
        grid=(B, C // ct),
        in_specs=in_specs,
        out_specs=pl.BlockSpec((1, ct, S, S), lambda b, cc: (b, cc, 0, 0)),
        compiler_params=pltpu.CompilerParams(
            dimension_semantics=("parallel", "parallel"),
            vmem_limit_bytes=vmem_limit_bytes),
    )(*args)


# ------------------------------ JAX glue ------------------------------------

def get_sinusoid_encoding_table(n_position, d_hid):
    position = jnp.arange(n_position, dtype=jnp.float32)[:, None]
    div_term = jnp.exp(jnp.arange(0, d_hid, 2, dtype=jnp.float32)
                       * (-math.log(10000.0) / d_hid))
    angles = position * div_term                         # [n_position, d_hid//2]
    table = jnp.zeros((n_position, d_hid), dtype=jnp.float32)
    table = table.at[:, 0::2].set(jnp.sin(angles))
    table = table.at[:, 1::2].set(jnp.cos(angles))
    return table


@functools.lru_cache(maxsize=None)
def make_rope_tables(max_position, embedding_size):
    # cached: RoPE tables are built once per (max_len, head_size), not per call
    table = get_sinusoid_encoding_table(max_position, embedding_size)
    cos_position = jnp.repeat(table[:, 1::2], 2, axis=-1)   # repeat_interleave(2)
    sin_position = jnp.repeat(table[:, 0::2], 2, axis=-1)
    return cos_position, sin_position


def apply_rope(qw, cos_position, sin_position):
    seq_len = qw.shape[-2]
    qw2 = jnp.stack([-qw[..., 1::2], qw[..., 0::2]], axis=-1).reshape(qw.shape)
    return qw * cos_position[:seq_len] + qw2 * sin_position[:seq_len]


def init_params(key, hidden_size, event_hidden_size, head_size, use_bias=True):
    k1, k2, k3, k4 = jax.random.split(key, 4)
    params = {
        # nn.Linear(hidden_size, 2*head_size): weight [2*head_size, hidden_size]
        "dense_w": 0.02 * jax.random.normal(k1, (2 * head_size, hidden_size), jnp.float32),
        "dense_b": 0.02 * jax.random.normal(k2, (2 * head_size,), jnp.float32)
        if use_bias else jnp.zeros((2 * head_size,), jnp.float32),
        # nn.Linear(event_hidden_size, head_size): weight [head_size, event_hidden_size]
        "event_w": 0.02 * jax.random.normal(k3, (head_size, event_hidden_size), jnp.float32),
        "event_b": 0.02 * jax.random.normal(k4, (head_size,), jnp.float32)
        if use_bias else jnp.zeros((head_size,), jnp.float32),
    }
    return params


def global_pointer_forward(params, inputs, event_inputs, *, head_size,
                           rope=True, tril_mask=True, max_len=512,
                           out_dtype=jnp.float32, mxu_dtype=None):
    # dense projections (glue); fold 1/sqrt(head_size) into the event projection
    scale = head_size ** -0.5
    sequence_output = inputs @ params["dense_w"].T + params["dense_b"]          # [B,S,2D]
    event_output = (event_inputs @ params["event_w"].T + params["event_b"]) * scale  # [C,D]

    qw = sequence_output[..., :head_size]     # [B,S,D]
    kw = sequence_output[..., head_size:]     # [B,S,D]

    if rope:
        cos_pos, sin_pos = make_rope_tables(max_len, head_size)
        qw = apply_rope(qw, cos_pos, sin_pos)
        kw = apply_rope(kw, cos_pos, sin_pos)

    # hot path in Pallas: einsum('bmd,bnd,bcd->bcmn') + tril mask + scaling
    return global_pointer_logits(qw, kw, event_output, head_size=head_size,
                                 tril_mask=tril_mask, out_dtype=out_dtype,
                                 mxu_dtype=mxu_dtype)


def reference_forward(params, inputs, event_inputs, *, head_size,
                      rope=True, tril_mask=True, max_len=512):
    sequence_output = inputs @ params["dense_w"].T + params["dense_b"]
    event_output = event_inputs @ params["event_w"].T + params["event_b"]
    B = sequence_output.shape[0]
    event_b = jnp.broadcast_to(event_output[None], (B,) + event_output.shape)
    qw = sequence_output[..., :head_size]
    kw = sequence_output[..., head_size:]
    if rope:
        cos_pos, sin_pos = make_rope_tables(max_len, head_size)
        qw = apply_rope(qw, cos_pos, sin_pos)
        kw = apply_rope(kw, cos_pos, sin_pos)
    logits = jnp.einsum('bmd,bnd,bcd->bcmn', qw, kw, event_b)
    if tril_mask:
        s = logits.shape[-1]
        tril = jnp.tril(jnp.ones((s, s), jnp.float32), -1)
        logits = logits - tril[None, None] * 1e12
    return logits / (head_size ** 0.5)


# ------------------------------- main ---------------------------------------

if __name__ == "__main__":
    # small shapes consistent with the module's forward
    B, S = 2, 8                # batch, sequence length
    HIDDEN = 32                # hidden_size
    EVENT_HIDDEN = 32          # event_hidden_size
    C = 4                      # number of event types (rows of event_inputs)
    HEAD_SIZE = 32
    MAX_LEN = 512

    key = jax.random.PRNGKey(0)
    kp, kx, ke = jax.random.split(key, 3)

    params = init_params(kp, HIDDEN, EVENT_HIDDEN, HEAD_SIZE, use_bias=True)
    inputs = jax.random.normal(kx, (B, S, HIDDEN), jnp.float32)
    event_inputs = jax.random.normal(ke, (C, EVENT_HIDDEN), jnp.float32)

    out = global_pointer_forward(params, inputs, event_inputs,
                                 head_size=HEAD_SIZE, rope=True,
                                 tril_mask=True, max_len=MAX_LEN)
    out = jax.block_until_ready(out)

    ref = reference_forward(params, inputs, event_inputs,
                            head_size=HEAD_SIZE, rope=True,
                            tril_mask=True, max_len=MAX_LEN)
    assert out.shape == (B, C, S, S), out.shape
    assert jnp.allclose(out, ref, atol=1e-4, rtol=1e-4), "mismatch vs reference"

    print("KERNEL_OK")
</pallas_src>

<mosaic_0001>
module attributes {stable_mosaic.version = 11 : i64} {
  func.func @_global_pointer_kernel(%arg0: i32, %arg1: i32, %arg2: memref<1x8x32xf32, #tpu.memory_space<vmem>>, %arg3: memref<1x8x32xf32, #tpu.memory_space<vmem>>, %arg4: memref<4x1x32xf32, #tpu.memory_space<vmem>>, %arg5: memref<8x8xf32, #tpu.memory_space<vmem>>, %arg6: memref<1x4x8x8xf32, #tpu.memory_space<vmem>>) attributes {dimension_semantics = [#tpu.dimension_semantics<parallel>, #tpu.dimension_semantics<parallel>], iteration_bounds = array<i64: 2, 1>, scalar_prefetch = 0 : i64, scratch_operands = 0 : i64, tpu.core_type = #tpu.core_type<tc>, window_params = [{transform_indices = @transform_0, window_bounds = array<i64: 1, 8, 32>}, {transform_indices = @transform_1, window_bounds = array<i64: 1, 8, 32>}, {transform_indices = @transform_2, window_bounds = array<i64: 4, 1, 32>}, {pipeline_mode = #tpu.pipeline_mode<synchronous>, transform_indices = @transform_3, window_bounds = array<i64: 8, 8>}, {transform_indices = @transform_4, window_bounds = array<i64: 1, 4, 8, 8>}]} {
    %c0 = arith.constant 0 : index
    %c0_0 = arith.constant 0 : index
    %c0_1 = arith.constant 0 : index
    %0 = vector.load %arg2[%c0, %c0_0, %c0_1] : memref<1x8x32xf32, #tpu.memory_space<vmem>>, vector<1x8x32xf32>
    %1 = vector.shape_cast %0 : vector<1x8x32xf32> to vector<8x32xf32>
    %c0_2 = arith.constant 0 : index
    %c0_3 = arith.constant 0 : index
    %c0_4 = arith.constant 0 : index
    %2 = vector.load %arg3[%c0_2, %c0_3, %c0_4] : memref<1x8x32xf32, #tpu.memory_space<vmem>>, vector<1x8x32xf32>
    %3 = vector.shape_cast %2 : vector<1x8x32xf32> to vector<8x32xf32>
    %c0_5 = arith.constant 0 : index
    %c0_6 = arith.constant 0 : index
    %c0_7 = arith.constant 0 : index
    %4 = vector.load %arg4[%c0_5, %c0_6, %c0_7] : memref<4x1x32xf32, #tpu.memory_space<vmem>>, vector<4x1x32xf32>
    %5 = vector.shape_cast %1 : vector<8x32xf32> to vector<1x8x32xf32>
    %6 = vector.broadcast %4 : vector<4x1x32xf32> to vector<4x8x32xf32>
    %7 = vector.broadcast %5 : vector<1x8x32xf32> to vector<4x8x32xf32>
    %8 = arith.mulf %6, %7 : vector<4x8x32xf32>
    %9 = vector.shape_cast %8 : vector<4x8x32xf32> to vector<32x32xf32>
    %cst = arith.constant dense<0.000000e+00> : vector<32x8xf32>
    %10 = tpu.matmul %9, %3, %cst {dimension_numbers = #tpu.dot_dimension_numbers<[1], [1], [0], [0], [0, 0, 1, 0], [], []>} : vector<32x32xf32>, vector<8x32xf32>, vector<32x8xf32> -> vector<32x8xf32>
    %11 = vector.shape_cast %10 : vector<32x8xf32> to vector<4x8x8xf32>
    %c0_8 = arith.constant 0 : index
    %c0_9 = arith.constant 0 : index
    %12 = vector.load %arg5[%c0_8, %c0_9] : memref<8x8xf32, #tpu.memory_space<vmem>>, vector<8x8xf32>
    %13 = vector.shape_cast %12 : vector<8x8xf32> to vector<1x8x8xf32>
    %14 = vector.broadcast %13 : vector<1x8x8xf32> to vector<4x8x8xf32>
    %15 = arith.addf %11, %14 : vector<4x8x8xf32>
    %c0_10 = arith.constant 0 : index
    %c0_11 = arith.constant 0 : index
    %c0_12 = arith.constant 0 : index
    %c0_13 = arith.constant 0 : index
    %16 = vector.load %arg6[%c0_10, %c0_11, %c0_12, %c0_13] : memref<1x4x8x8xf32, #tpu.memory_space<vmem>>, vector<1x4x8x8xf32>
    %17 = vector.shape_cast %16 : vector<1x4x8x8xf32> to vector<4x8x8xf32>
    %18 = vector.shape_cast %15 : vector<4x8x8xf32> to vector<1x4x8x8xf32>
    tpu.vector_store %arg6[%c0_10, %c0_11, %c0_12, %c0_13], %18 {strides = array<i32>} : memref<1x4x8x8xf32, #tpu.memory_space<vmem>>, vector<1x4x8x8xf32>,
    return
  }
  func.func @transform_0(%arg0: i32, %arg1: i32) -> (i32, i32, i32) {
    %c0_i32 = arith.constant 0 : i32
    %c0_i32_0 = arith.constant 0 : i32
    %c0_i32_1 = arith.constant 0 : i32
    return %arg0, %c0_i32, %c0_i32_0 : i32, i32, i32
  }
  func.func @transform_1(%arg0: i32, %arg1: i32) -> (i32, i32, i32) {
    %c0_i32 = arith.constant 0 : i32
    %c0_i32_0 = arith.constant 0 : i32
    %c0_i32_1 = arith.constant 0 : i32
    return %arg0, %c0_i32, %c0_i32_0 : i32, i32, i32
  }
  func.func @transform_2(%arg0: i32, %arg1: i32) -> (i32, i32, i32) {
    %c0_i32 = arith.constant 0 : i32
    %c0_i32_0 = arith.constant 0 : i32
    %c0_i32_1 = arith.constant 0 : i32
    return %arg1, %c0_i32, %c0_i32_0 : i32, i32, i32
  }
  func.func @transform_3(%arg0: i32, %arg1: i32) -> (i32, i32) {
    %c0_i32 = arith.constant 0 : i32
    %c0_i32_0 = arith.constant 0 : i32
    %c0_i32_1 = arith.constant 0 : i32
    return %c0_i32, %c0_i32_0 : i32, i32
  }
  func.func @transform_4(%arg0: i32, %arg1: i32) -> (i32, i32, i32, i32) {
    %c0_i32 = arith.constant 0 : i32
    %c0_i32_0 = arith.constant 0 : i32
    %c0_i32_1 = arith.constant 0 : i32
    return %arg0, %arg1, %c0_i32, %c0_i32_0 : i32, i32, i32, i32
  }
}

</mosaic_0001>

<llo_original>
// kernel: tpu_custom_call.1
$region0: #{tpu_custom_call.1}
  #allocation0 [shape = 'u32[]', space=smem, size = 0x4, offset = 0x4, fixed_abs, tag = 'smem constant byte address 0x4 - core index']
  #allocation1 [shape = 'u32[144,128]{1,0:T(1,128)}', space=vmem, size = 0x12000, scoped, tag = 'internal scratch']
  %s0 = inlined_call_operand.hbm [shape: f32[2,8,32], index: 0, kind: input, shape index: {}]
  %s1 = inlined_call_operand.hbm [shape: f32[2,8,32], index: 1, kind: input, shape index: {}]
  %s2 = inlined_call_operand.hbm [shape: f32[4,1,32], index: 2, kind: input, shape index: {}]
  %s3 = inlined_call_operand.vmem [shape: f32[8,8], index: 3, kind: input, shape index: {}]
  %s4 = inlined_call_operand.hbm [shape: f32[2,4,8,8], index: 4, kind: output, shape index: {}]
  %s5 = sld [smem:[#allocation0]]
  $region61: #{tpu_custom_call.1} parent=0
    _
  %s7 = ssub.s32 1, %s5
  %s8 = scalar_select 0, %s7, %s5
  $region1: #{tpu_custom_call.1} parent=0
    #allocation2 [shape = 'u8[8192]{0}', space=vmem, size = 0x2000, scoped, tag = 'input window, operand 0']
    #allocation3 [shape = 's32[2]{0}', space=sflag, size = 0x8, scoped, tag = 'scoped memory for tpu_custom_call.1']
    #allocation4 [shape = 's32[2]{0}', space=sflag, size = 0x8, scoped, tag = 'scoped memory for tpu_custom_call.1']
    #allocation5 [shape = 'u8[8192]{0}', space=vmem, size = 0x2000, scoped, tag = 'input window, operand 1']
    #allocation6 [shape = 's32[2]{0}', space=sflag, size = 0x8, scoped, tag = 'scoped memory for tpu_custom_call.1']
    #allocation7 [shape = 'u8[2048]{0}', space=vmem, size = 0x800, scoped, tag = 'input window, operand 2, single buffered']
    #allocation8 [shape = 'u8[32768]{0}', space=vmem, size = 0x8000, scoped, tag = 'output window, operand 0']
    %9 = vsyncpa [#allocation3], 0
    %s10 = scalar_lea.sflag [#allocation3], 1
    %11 = vsyncpa %s10, 0
    %12 = vsyncpa [#allocation6], 0
    %s13 = scalar_lea.sflag [#allocation6], 1
    %14 = vsyncpa %s13, 0
    %15 = vsyncpa [#allocation4], 0
    %s16 = scalar_lea.sflag [#allocation4], 1
    %17 = vsyncpa %s16, 0
    loop: start=0, step=1, limit=4
    $region2: #{tpu_custom_call.1} parent=1 // loop_pre_header
      _
    $region3: #{tpu_custom_call.1} parent=1 // loop_header
      %s19 = sphi 0, %s23
      %p20 = scmp.ge.s32.totalorder %s19, 4
      %s26 = sphi 0, %s38
      %s27 = sphi 0, %s34
      %s28 = sphi 0, %s26
      %s29 = sphi 0, %s27
      %s30 = sphi 0, %s28
      %s31 = sphi 0, %s29
      %s41 = sphi 0, %s43
      %s44 = sphi 0, %s41
      %s45 = sphi 0, %s44
      %s61 = sphi 0, %s45
      %s67 = sphi 0, %s69
      %s70 = sphi 0, %s67
      %s71 = sphi 0, %s70
      %s87 = sphi 0, %s71
      %s93 = sphi 0, %s95
      %s96 = sphi 0, %s93
      %s97 = sphi 0, %s96
      %s113 = sphi 0, %s97
      %s117 = sphi 0, %s117
      %s119 = sphi 0, %s117
      %s120 = sphi 0, %s119
      %s134 = sphi 0, %s120
      %s142 = sphi 0, %s144
      %s145 = sphi 0, %s142
      %s146 = sphi 0, %s145
      %s162 = sphi 0, %s146
    $region4: #{tpu_custom_call.1} parent=1 // loop_header_branch
      %22 = sbr.rel (%p20) target = $region8
    $region5: #{tpu_custom_call.1} parent=1 // loop_body
      %s24 = ssub.s32 %s19, 1
      %s25 = ssub.s32 %s19, 2
      %s32 = sadd.s32 1, %s27
      %p33 = scmp.ge.s32.totalorder %s32, 1
      %s34 = scalar_select %p33, 0, %s32
      %s35 = sadd.s32 1, %s26
      %s36 = scalar_select %p33, %s35, %s26
      %p37 = scmp.ge.s32.totalorder %s36, 2
      %s38 = scalar_select %p37, 0, %s36
      %s39 = ssub.s32 %s26, %s38
      %p40 = scmp.eq.s32.totalorder %s39, 0
      %s42 = sadd.s32 %s41, 1
      %s43 = scalar_select %p40, %s41, %s42
      %p46 = pneg %p40
      %p47 = scmp.eq.s32.totalorder %s19, 1
      %p48 = por %p46, %p47
      %p49 = scmp.ne.s32.totalorder %s41, %s44
      %p50 = scmp.eq.s32.totalorder %s19, 0
      %p51 = por %p49, %p50
      %p52 = scmp.ne.s32.totalorder %s41, %s44
      %p53 = scmp.eq.s32.totalorder %s24, 1
      %p54 = por %p52, %p53
      %p55 = scmp.ne.s32.totalorder %s44, %s45
      %p56 = scmp.eq.s32.totalorder %s24, 0
      %p57 = por %p55, %p56
      %p58 = scmp.ne.s32.totalorder %s44, %s45
      %p59 = scmp.eq.s32.totalorder %s25, 1
      %p60 = por %p58, %p59
      %p62 = scmp.ne.s32.totalorder %s45, %s61
      %p63 = scmp.eq.s32.totalorder %s25, 0
      %p64 = por %p62, %p63
      %s65 = ssub.s32 %s26, %s38
      %p66 = scmp.eq.s32.totalorder %s65, 0
      %s68 = sadd.s32 %s67, 1
      %s69 = scalar_select %p66, %s67, %s68
      %p72 = pneg %p66
      %p73 = scmp.eq.s32.totalorder %s19, 1
      %p74 = por %p72, %p73
      %p75 = scmp.ne.s32.totalorder %s67, %s70
      %p76 = scmp.eq.s32.totalorder %s19, 0
      %p77 = por %p75, %p76
      %p78 = scmp.ne.s32.totalorder %s67, %s70
      %p79 = scmp.eq.s32.totalorder %s24, 1
      %p80 = por %p78, %p79
      %p81 = scmp.ne.s32.totalorder %s70, %s71
      %p82 = scmp.eq.s32.totalorder %s24, 0
      %p83 = por %p81, %p82
      %p84 = scmp.ne.s32.totalorder %s70, %s71
      %p85 = scmp.eq.s32.totalorder %s25, 1
      %p86 = por %p84, %p85
      %p88 = scmp.ne.s32.totalorder %s71, %s87
      %p89 = scmp.eq.s32.totalorder %s25, 0
      %p90 = por %p88, %p89
      %s91 = ssub.s32 %s27, %s34
      %p92 = scmp.eq.s32.totalorder %s91, 0
      %s94 = sadd.s32 %s93, 1
      %s95 = scalar_select %p92, %s93, %s94
      %p98 = pneg %p92
      %p99 = scmp.eq.s32.totalorder %s19, 1
      %p100 = por %p98, %p99
      %p101 = scmp.ne.s32.totalorder %s93, %s96
      %p102 = scmp.eq.s32.totalorder %s19, 0
      %p103 = por %p101, %p102
      %p104 = scmp.ne.s32.totalorder %s93, %s96
      %p105 = scmp.eq.s32.totalorder %s24, 1
      %p106 = por %p104, %p105
      %p107 = scmp.ne.s32.totalorder %s96, %s97
      %p108 = scmp.eq.s32.totalorder %s24, 0
      %p109 = por %p107, %p108
      %p110 = scmp.ne.s32.totalorder %s96, %s97
      %p111 = scmp.eq.s32.totalorder %s25, 1
      %p112 = por %p110, %p111
      %p114 = scmp.ne.s32.totalorder %s97, %s113
      %p115 = scmp.eq.s32.totalorder %s25, 0
      %p116 = por %p114, %p115
      %s118 = sadd.s32 %s117, 1
      %p121 = scmp.eq.s32.totalorder %s19, 1
      %p122 = scmp.ne.s32.totalorder %s117, %s119
      %p123 = scmp.eq.s32.totalorder %s19, 0
      %p124 = por %p122, %p123
      %p125 = scmp.ne.s32.totalorder %s117, %s119
      %p126 = scmp.eq.s32.totalorder %s24, 1
      %p127 = por %p125, %p126
      %p128 = scmp.ne.s32.totalorder %s119, %s120
      %p129 = scmp.eq.s32.totalorder %s24, 0
      %p130 = por %p128, %p129
      %p131 = scmp.ne.s32.totalorder %s119, %s120
      %p132 = scmp.eq.s32.totalorder %s25, 1
      %p133 = por %p131, %p132
      %p135 = scmp.ne.s32.totalorder %s120, %s134
      %p136 = scmp.eq.s32.totalorder %s25, 0
      %p137 = por %p135, %p136
      %s138 = ssub.s32 %s26, %s38
      %s139 = ssub.s32 %s27, %s34
      %s140 = sor.u32 %s138, %s139
      %p141 = scmp.eq.s32.totalorder %s140, 0
      %s143 = sadd.s32 %s142, 1
      %s144 = scalar_select %p141, %s142, %s143
      %p147 = pneg %p141
      %p148 = scmp.eq.s32.totalorder %s19, 1
      %p149 = por %p147, %p148
      %p150 = scmp.ne.s32.totalorder %s142, %s145
      %p151 = scmp.eq.s32.totalorder %s19, 0
      %p152 = por %p150, %p151
      %p153 = scmp.ne.s32.totalorder %s142, %s145
      %p154 = scmp.eq.s32.totalorder %s24, 1
      %p155 = por %p153, %p154
      %p156 = scmp.ne.s32.totalorder %s145, %s146
      %p157 = scmp.eq.s32.totalorder %s24, 0
      %p158 = por %p156, %p157
      %p159 = scmp.ne.s32.totalorder %s145, %s146
      %p160 = scmp.eq.s32.totalorder %s25, 1
      %p161 = por %p159, %p160
      %p163 = scmp.ne.s32.totalorder %s146, %s162
      %p164 = scmp.eq.s32.totalorder %s25, 0
      %p165 = por %p163, %p164
      %p166 = scmp.le.s32.totalorder 1, %s19
      %p167 = scmp.lt.s32.totalorder %s19, 3
      %p168 = pnand %p166, %p167
      %p169 = pneg %p168
      // Predicated region
      $region9: #{tpu_custom_call.1} parent=5 // pred_check
        _
      $region10: #{tpu_custom_call.1} parent=5 // pred_check_branch
        %171 = sbr.rel (%p168) target = $region12
      $region11: #{tpu_custom_call.1} parent=5 // pred_region
        %s172 = ssub.s32 %s19, 1
        // Predicated region
        $region13: #{tpu_custom_call.1} parent=11 // pred_check
          %p173 = pneg %p109
        $region14: #{tpu_custom_call.1} parent=11 // pred_check_branch
          %175 = sbr.rel (%p173) target = $region16
        $region15: #{tpu_custom_call.1} parent=11 // pred_region
          %s176 = smul.u32 4, %s29
          %s178 = ssub.s32 64, 64
          %179 = vsyncadd [#allocation6], %s178
          %s180 = smul.addr %s176, 16
          %s181 = scalar_lea.hbm %s2, %s180
          %s182 = sshll.u32 [#allocation7], 4
          %s183 = int_to_ptr.vmem [resolvable:$true] %s182
          %188 = dma.hbm_to_vmem [thread:$0]  %s181, 64, %s183, [#allocation6], 16, 16, 1
        $region16: #{tpu_custom_call.1} parent=11 // pred_fallthru
          _
        // Predicated region
        $region17: #{tpu_custom_call.1} parent=11 // pred_check
          %p189 = pneg %p130
        $region18: #{tpu_custom_call.1} parent=11 // pred_check_branch
          %191 = sbr.rel (%p189) target = $region20
        $region19: #{tpu_custom_call.1} parent=11 // pred_region
          _
        $region20: #{tpu_custom_call.1} parent=11 // pred_fallthru
          _
      $region12: #{tpu_custom_call.1} parent=5 // pred_fallthru
        _
      %p192 = scmp.lt.s32.totalorder %s19, 2
      // Predicated region
      $region21: #{tpu_custom_call.1} parent=5 // pred_check
        %p193 = pneg %p192
      $region22: #{tpu_custom_call.1} parent=5 // pred_check_branch
        %195 = sbr.rel (%p193) target = $region24
      $region23: #{tpu_custom_call.1} parent=5 // pred_region
        // Predicated region
        $region25: #{tpu_custom_call.1} parent=23 // pred_check
          %p196 = pneg %p51
        $region26: #{tpu_custom_call.1} parent=23 // pred_check_branch
          %198 = sbr.rel (%p196) target = $region28
        $region27: #{tpu_custom_call.1} parent=23 // pred_region
          %s199 = sand.u32 %s41, 1
          %s200 = scalar_lea.sflag [#allocation3], %s199
          %s201 = sand.u32 %s41, 1
          %s202 = smul.addr %s201, 8
          %s203 = scalar_lea.vmem [#allocation2], %s202
          %s205 = ssub.s32 128, 128
          %206 = vsyncadd %s200, %s205
          %s207 = smul.addr %s26, 128
          %s208 = scalar_lea.hbm %s0, %s207
          %s210 = sshll.u32 %s203, 4
          %s211 = int_to_ptr.vmem [resolvable:$true] %s210
          %213 = dma.hbm_to_vmem [thread:$0]  %s208, 128, %s211, %s200
        $region28: #{tpu_custom_call.1} parent=23 // pred_fallthru
          _
        // Predicated region
        $region29: #{tpu_custom_call.1} parent=23 // pred_check
          %p214 = pneg %p77
        $region30: #{tpu_custom_call.1} parent=23 // pred_check_branch
          %216 = sbr.rel (%p214) target = $region32
        $region31: #{tpu_custom_call.1} parent=23 // pred_region
          %s217 = sand.u32 %s19, 1
          %s218 = scalar_lea.sflag [#allocation6], %s217
          %s219 = sand.u32 %s67, 1
          %s220 = smul.addr %s219, 8
          %s221 = scalar_lea.vmem [#allocation5], %s220
          %s223 = ssub.s32 128, 128
          %224 = vsyncadd %s218, %s223
          %s225 = smul.addr %s26, 128
          %s226 = scalar_lea.hbm %s1, %s225
          %s228 = sshll.u32 %s221, 4
          %s229 = int_to_ptr.vmem [resolvable:$true] %s228
          %231 = dma.hbm_to_vmem [thread:$0]  %s226, 128, %s229, %s218
        $region32: #{tpu_custom_call.1} parent=23 // pred_fallthru
          _
      $region24: #{tpu_custom_call.1} parent=5 // pred_fallthru
        _
      %p232 = scmp.le.s32.totalorder 1, %s19
      %p233 = scmp.lt.s32.totalorder %s19, 3
      %p234 = pnand %p232, %p233
      %p235 = pneg %p234
      // Predicated region
      $region33: #{tpu_custom_call.1} parent=5 // pred_check
        _
      $region34: #{tpu_custom_call.1} parent=5 // pred_check_branch
        %237 = sbr.rel (%p234) target = $region36
      $region35: #{tpu_custom_call.1} parent=5 // pred_region
        %s238 = ssub.s32 %s19, 1
        %s239 = sand.u32 %s44, 1
        %s240 = scalar_lea.sflag [#allocation3], %s239
        %s241 = sand.u32 %s44, 1
        %s242 = smul.addr %s241, 8
        %s243 = scalar_lea.vmem [#allocation2], %s242
        // Predicated region
        $region37: #{tpu_custom_call.1} parent=35 // pred_check
          %p244 = pneg %p57
        $region38: #{tpu_custom_call.1} parent=35 // pred_check_branch
          %246 = sbr.rel (%p244) target = $region40
        $region39: #{tpu_custom_call.1} parent=35 // pred_region
          %247 = dma.done %s240, 128
        $region40: #{tpu_custom_call.1} parent=35 // pred_fallthru
          _
        %s248 = sand.u32 %s24, 1
        %s249 = scalar_lea.sflag [#allocation6], %s248
        %s250 = sand.u32 %s70, 1
        %s251 = smul.addr %s250, 8
        %s252 = scalar_lea.vmem [#allocation5], %s251
        // Predicated region
        $region41: #{tpu_custom_call.1} parent=35 // pred_check
          %p253 = pneg %p83
        $region42: #{tpu_custom_call.1} parent=35 // pred_check_branch
          %255 = sbr.rel (%p253) target = $region44
        $region43: #{tpu_custom_call.1} parent=35 // pred_region
          %256 = dma.done %s249, 128
        $region44: #{tpu_custom_call.1} parent=35 // pred_fallthru
          _
        // Predicated region
        $region45: #{tpu_custom_call.1} parent=35 // pred_check
          %p257 = pneg %p109
        $region46: #{tpu_custom_call.1} parent=35 // pred_check_branch
          %259 = sbr.rel (%p257) target = $region48
        $region47: #{tpu_custom_call.1} parent=35 // pred_region
          %260 = dma.done [#allocation6], 64
        $region48: #{tpu_custom_call.1} parent=35 // pred_fallthru
          _
        %s261 = sand.u32 %s44, 1
        %s262 = scalar_lea.sflag [#allocation3], %s261
        %s263 = sand.u32 %s44, 1
        %s264 = smul.addr %s263, 8
        %s265 = scalar_lea.vmem [#allocation2], %s264
        %p266 = pneg %p57
        %p267 = pneg %p54
        %s268 = sand.u32 %s24, 1
        %s269 = scalar_lea.sflag [#allocation6], %s268
        %s270 = sand.u32 %s70, 1
        %s271 = smul.addr %s270, 8
        %s272 = scalar_lea.vmem [#allocation5], %s271
        %p273 = pneg %p83
        %p274 = pneg %p80
        %p275 = pneg %p109
        %p276 = pneg %p106
        %p277 = pneg %p130
        %p278 = pneg %p127
        %p279 = pneg %p158
        %p280 = pneg %p155
        %s281 = sand.u32 %s145, 1
        %s282 = scalar_lea.sflag [#allocation4], %s281
        %s283 = sand.u32 %s145, 1
        %s284 = smul.addr %s283, 32
        %s285 = scalar_lea.vmem [#allocation8], %s284
        %s286 = smul.u32 4, %s29
        %s287 = smul.u32 4, %s29
        %v288 = vld [vmem:[%s243] sm:$0xff]
        %v289 = vld [vmem:[%s252] sm:$0xff]
        %v290 = vld [vmem:[#allocation7] sm:$0x1]
        %v291 = vld [vmem:[#allocation7 + $0x1] sm:$0x1]
        %v292 = vld [vmem:[#allocation7 + $0x2] sm:$0x1]
        %v293 = vld [vmem:[#allocation7 + $0x3] sm:$0x1]
        %v298 = vlaneseq
        %v299 = vshrl.u32 %v298, 7
        %v300 = vsub.s32 0, %v299
        %v301 = vrot.slane %v290, %v300
        %v302 = vlaneseq
        %v303 = vshrl.u32 %v302, 7
        %v304 = vsub.s32 0, %v303
        %v305 = vrot.slane %v291, %v304
        %v306 = vlaneseq
        %v307 = vshrl.u32 %v306, 7
        %v308 = vsub.s32 0, %v307
        %v309 = vrot.slane %v292, %v308
        %v310 = vlaneseq
        %v311 = vshrl.u32 %v310, 7
        %v312 = vsub.s32 0, %v311
        %v313 = vrot.slane %v293, %v312
        %v318 = vmul.f32 %v301, %v288
        %v319 = vmul.f32 %v305, %v288
        %v320 = vmul.f32 %v309, %v288
        %v321 = vmul.f32 %v313, %v288
        %vm322 = vcmask 261120
        %v324 = vsel %vm322, %v318, 0
        %v327 = vsel %vm322, %v319, 0
        %v330 = vsel %vm322, %v320, 0
        %v333 = vsel %vm322, %v321, 0
        %v336 = vsel %vm322, %v289, 0
        %338 = vmatprep.subr.mxu0 0.0
        %339 = vmatpush1.xpose.msra.mxu0 %v336
        %340 = vmatprep.subr.mxu0 0.0
        %341 = vmatpush1.xpose.msra.mxu0 0.0
        %342 = vmatprep.subr.mxu0 0.0
        %343 = vmatpush1.xpose.msra.mxu0 0.0
        %344 = vmatprep.subr.mxu0 0.0
        %345 = vmatpush1.xpose.msra.mxu0 0.0
        %346 = vmatprep.subr.mxu0 0.0
        %347 = vmatpush1.xpose.msra.mxu0 0.0
        %348 = vmatprep.subr.mxu0 0.0
        %349 = vmatpush1.xpose.msra.mxu0 0.0
        %350 = vmatprep.subr.mxu0 0.0
        %351 = vmatpush1.xpose.msra.mxu0 0.0
        %352 = vmatprep.subr.mxu0 0.0
        %353 = vmatpush1.xpose.msra.mxu0 0.0
        %354 = vmatprep.subr.mxu0 0.0
        %355 = vmatpush1.xpose.msra.mxu0 0.0
        %356 = vmatprep.subr.mxu0 0.0
        %357 = vmatpush1.xpose.msra.mxu0 0.0
        %358 = vmatprep.subr.mxu0 0.0
        %359 = vmatpush1.xpose.msra.mxu0 0.0
        %360 = vmatprep.subr.mxu0 0.0
        %361 = vmatpush1.xpose.msra.mxu0 0.0
        %362 = vmatprep.subr.mxu0 0.0
        %363 = vmatpush1.xpose.msra.mxu0 0.0
        %364 = vmatprep.subr.mxu0 0.0
        %365 = vmatpush1.xpose.msra.mxu0 0.0
        %366 = vmatprep.subr.mxu0 0.0
        %367 = vmatpush1.xpose.msra.mxu0 0.0
        %368 = vmatprep.subr.mxu0 0.0
        %369 = vmatpush1.xpose.msra.mxu0 0.0
        %370 = vmatprep.subr.mxu0 0.0
        %371 = vmatpush1.xpose.msra.mxu0 0.0
        %372 = vmatprep.subr.mxu0 0.0
        %373 = vmatpush1.xpose.msra.mxu0 0.0
        %374 = vmatprep.subr.mxu0 0.0
        %375 = vmatpush1.xpose.msra.mxu0 0.0
        %376 = vmatprep.subr.mxu0 0.0
        %377 = vmatpush1.xpose.msra.mxu0 0.0
        %378 = vmatprep.subr.mxu0 0.0
        %379 = vmatpush1.xpose.msra.mxu0 0.0
        %380 = vmatprep.subr.mxu0 0.0
        %381 = vmatpush1.xpose.msra.mxu0 0.0
        %382 = vmatprep.subr.mxu0 0.0
        %383 = vmatpush1.xpose.msra.mxu0 0.0
        %384 = vmatprep.subr.mxu0 0.0
        %385 = vmatpush1.xpose.msra.mxu0 0.0
        %386 = vmatprep.subr.mxu0 0.0
        %387 = vmatpush1.xpose.msra.mxu0 0.0
        %388 = vmatprep.subr.mxu0 0.0
        %389 = vmatpush1.xpose.msra.mxu0 0.0
        %390 = vmatprep.subr.mxu0 0.0
        %391 = vmatpush1.xpose.msra.mxu0 0.0
        %392 = vmatprep.subr.mxu0 0.0
        %393 = vmatpush1.xpose.msra.mxu0 0.0
        %394 = vmatprep.subr.mxu0 0.0
        %395 = vmatpush1.xpose.msra.mxu0 0.0
        %396 = vmatprep.subr.mxu0 0.0
        %397 = vmatpush1.xpose.msra.mxu0 0.0
        %398 = vmatprep.subr.mxu0 0.0
        %399 = vmatpush1.xpose.msra.mxu0 0.0
        %400 = vmatprep.subr.mxu0 0.0
        %401 = vmatpush1.xpose.msra.mxu0 0.0
        %402 = vmatprep.mubr.f32.mxu0 0.0
        %403 = vmatmul.mubr.f32.gmra.mrb[0].mxu0 %v324
        %v404 = vpop.f32.mrb[0].mxu0
        %v405 = vadd.f32 0.0, %v404
        %v406 = vpop.f32.mrb[0].mxu0
        %407 = vmatprep.mubr.f32.mxu0 0.0
        %408 = vmatmul.mubr.f32.gmra.mrb[0].mxu0 %v327
        %v409 = vpop.f32.mrb[0].mxu0
        %v410 = vadd.f32 0.0, %v409
        %v411 = vpop.f32.mrb[0].mxu0
        %412 = vmatprep.mubr.f32.mxu0 0.0
        %413 = vmatmul.mubr.f32.gmra.mrb[0].mxu0 %v330
        %v414 = vpop.f32.mrb[0].mxu0
        %v415 = vadd.f32 0.0, %v414
        %v416 = vpop.f32.mrb[0].mxu0
        %417 = vmatprep.mubr.f32.mxu0 0.0
        %418 = vmatmul.mubr.f32.gmra.mrb[0].mxu0 %v333
        %v419 = vpop.f32.mrb[0].mxu0
        %v420 = vadd.f32 0.0, %v419
        %v421 = vpop.f32.mrb[0].mxu0
        %422 = vdwg.mxu0
        %v423 = vld [vmem:[%s3] sm:$0xff]
        %v424 = vadd.f32 %v405, %v423
        %v425 = vadd.f32 %v410, %v423
        %v426 = vadd.f32 %v415, %v423
        %v427 = vadd.f32 %v420, %v423
        %vm428 = vcmask 64512
        %429 = vst.msk [vmem:[%s285] sm:$0xff] %vm428, %v424
        %430 = vst.msk [vmem:[%s285 + $0x8] sm:$0xff] %vm428, %v425
        %431 = vst.msk [vmem:[%s285 + $0x10] sm:$0xff] %vm428, %v426
        %432 = vst.msk [vmem:[%s285 + $0x18] sm:$0xff] %vm428, %v427
        %s433 = sand.u32 %s145, 1
        %s434 = scalar_lea.sflag [#allocation4], %s433
        %s435 = sand.u32 %s145, 1
        %s436 = smul.addr %s435, 32
        %s437 = scalar_lea.vmem [#allocation8], %s436
        // Predicated region
        $region49: #{tpu_custom_call.1} parent=35 // pred_check
          %p438 = pneg %p155
        $region50: #{tpu_custom_call.1} parent=35 // pred_check_branch
          %440 = sbr.rel (%p438) target = $region52
        $region51: #{tpu_custom_call.1} parent=35 // pred_region
          %s441 = smul.u32 4, %s29
          %s443 = ssub.s32 512, 512
          %444 = vsyncadd %s434, %s443
          %s445 = smul.addr %s28, 4
          %s446 = sadd.s32 %s441, %s445
          %s447 = smul.addr %s446, 128
          %s448 = scalar_lea.hbm %s4, %s447
          %s449 = sshll.u32 %s437, 4
          %s450 = int_to_ptr.vmem [resolvable:$true] %s449
          %455 = dma.vmem_to_hbm [thread:$0]  %s450, 512, %s448, %s434, 128, 128, 8
        $region52: #{tpu_custom_call.1} parent=35 // pred_fallthru
          _
      $region36: #{tpu_custom_call.1} parent=5 // pred_fallthru
        _
      %p456 = scmp.le.s32.totalorder 2, %s19
      // Predicated region
      $region53: #{tpu_custom_call.1} parent=5 // pred_check
        %p457 = pneg %p456
      $region54: #{tpu_custom_call.1} parent=5 // pred_check_branch
        %459 = sbr.rel (%p457) target = $region56
      $region55: #{tpu_custom_call.1} parent=5 // pred_region
        %s460 = ssub.s32 %s19, 2
        // Predicated region
        $region57: #{tpu_custom_call.1} parent=55 // pred_check
          %p461 = pneg %p161
        $region58: #{tpu_custom_call.1} parent=55 // pred_check_branch
          %463 = sbr.rel (%p461) target = $region60
        $region59: #{tpu_custom_call.1} parent=55 // pred_region
          %s464 = sand.u32 %s146, 1
          %s465 = scalar_lea.sflag [#allocation4], %s464
          %s466 = sand.u32 %s146, 1
          %s467 = smul.addr %s466, 32
          %s468 = scalar_lea.vmem [#allocation8], %s467
          %469 = dma.done %s465, 512
        $region60: #{tpu_custom_call.1} parent=55 // pred_fallthru
          _
      $region56: #{tpu_custom_call.1} parent=5 // pred_fallthru
        _
    $region6: #{tpu_custom_call.1} parent=1 // loop_footer
      %s23 = sadd.s32 1, %s19
    $region7: #{tpu_custom_call.1} parent=1 // loop_footer_branch
      %18 = sbr.rel target = $region3
    $region8: #{tpu_custom_call.1} parent=1 // loop_exit
      _
    %470 = vsyncpa [#allocation3], 1
    %s471 = scalar_lea.sflag [#allocation3], 1
    %472 = vsyncpa %s471, 1
    %473 = vsyncpa [#allocation6], 1
    %s474 = scalar_lea.sflag [#allocation6], 1
    %475 = vsyncpa %s474, 1
    %476 = vsyncpa [#allocation4], 1
    %s477 = scalar_lea.sflag [#allocation4], 1
    %478 = vsyncpa %s477, 1

</llo_original>
